<compile_context>
chip_gen: v5e
topology: v5e:2x2
jax: 0.10.0
libtpu: 0.0.40
codegen_flags: <defaults>
</compile_context>

<pallas_src>
import jax
import jax.numpy as jnp
from jax.experimental import pallas as pl
from jax.experimental.pallas import tpu as pltpu


def majority_voter_kernel(x_ref, o_ref):
    x = x_ref[...]
    # Forward value of the module: +1 where x >= 0 (incl. -0.0), else -1
    # (NaN compares False -> -1, same as torch.where(x >= 0, 1, -1)).
    o_ref[...] = jnp.where(x >= 0, 1.0, -1.0).astype(o_ref.dtype)


def _pick_lanes(total, max_lanes=1024):
    """Largest multiple of 128 (<= max_lanes) that divides `total`; 0 if none."""
    lanes = max_lanes
    while lanes >= 128:
        if total % lanes == 0:
            return lanes
        lanes -= 128
    return 0


def _pick_block_rows(rows, lanes, itemsize, target_block_bytes=4 * 1024 * 1024):
    """Row-block size: ~4 MiB blocks, multiple of 8 sublanes, >=2 grid steps."""
    br = max(8, target_block_bytes // max(1, lanes * itemsize))
    br = min(br, rows)
    if rows > 8:
        # Cap so the grid has at least 2 programs -> both v7x TCs get work.
        half = max(8, (pl.cdiv(rows, 2) // 8) * 8)
        br = min(br, half)
    if br != rows:
        # (8,128) tiling constraint: block rows must be a multiple of 8 unless
        # the block spans the full row extent.
        br = max(8, (br // 8) * 8)
    return br


def _sign_pallas_2d(x2d):
    rows, lanes = x2d.shape
    br = _pick_block_rows(rows, lanes, x2d.dtype.itemsize)
    grid = (pl.cdiv(rows, br),)
    return pl.pallas_call(
        majority_voter_kernel,
        out_shape=jax.ShapeDtypeStruct((rows, lanes), x2d.dtype),
        grid=grid,
        in_specs=[pl.BlockSpec((br, lanes), lambda i: (i, 0))],
        out_specs=pl.BlockSpec((br, lanes), lambda i: (i, 0)),
        compiler_params=pltpu.CompilerParams(
            dimension_semantics=("parallel",),
            # ~16 MiB double-buffered footprint; raise v5e's 16 MiB default
            # scoped limit while staying well inside v7x's 64 MiB physical VMEM.
            vmem_limit_bytes=32 * 1024 * 1024,
        ),
    )(x2d)


def majority_voter(x, a=None):
    """Forward pass of Majority_Voter.

    x: activation tensor (any shape, e.g. NCHW float32).
    a: learnable scalar from the module; it only influences the backward STE
       polynomial, so it is unused in this forward kernel.
    """
    del a  # forward value does not depend on `a` (backward-only parameter)

    orig_shape = x.shape
    orig_dtype = x.dtype
    total = x.size

    lanes = _pick_lanes(total)
    if lanes == 0 or total == 0:
        # No 128-multiple divides the element count (tiny/odd input): a single
        # fused elementwise select is cheaper than padding or prefix+tail+concat.
        return jnp.where(x >= 0, 1.0, -1.0).astype(orig_dtype)

    rows = total // lanes
    x2d = x.reshape(rows, lanes)  # free: contiguous reshape, no pad, no copy
    out2d = _sign_pallas_2d(x2d)
    return out2d.reshape(orig_shape)


if __name__ == "__main__":
    key = jax.random.PRNGKey(0)

    def ref_fn(x):
        return jnp.where(x >= 0, 1.0, -1.0).astype(x.dtype)

    # Primary small NCHW input consistent with the module's conv-style usage.
    x = jax.random.normal(key, (2, 4, 16, 16), dtype=jnp.float32) * 2.0
    a = jnp.float32(1.0)  # parameter init exactly as in __init__ (forward-unused)
    out = jax.block_until_ready(majority_voter(x, a))
    assert out.shape == x.shape and out.dtype == jnp.float32
    assert bool(jnp.array_equal(out, ref_fn(x)))

    # Multi-block path (grid >= 2, exercises megacore-friendly tiling).
    k1, k2 = jax.random.split(key)
    x2 = jax.random.normal(k1, (4, 16, 32, 32), dtype=jnp.float32)
    out2 = jax.block_until_ready(majority_voter(x2, a))
    assert bool(jnp.array_equal(out2, ref_fn(x2)))

    # Odd-sized input (no 128-multiple divisor): fallback path.
    x3 = jax.random.normal(k2, (3, 5, 7, 9), dtype=jnp.float32)
    out3 = jax.block_until_ready(majority_voter(x3, a))
    assert bool(jnp.array_equal(out3, ref_fn(x3)))

    print("KERNEL_OK")
</pallas_src>

<mosaic_0001>
module attributes {stable_mosaic.version = 11 : i64} {
  func.func @majority_voter_kernel(%arg0: i32, %arg1: memref<2x1024xf32, #tpu.memory_space<vmem>>, %arg2: memref<2x1024xf32, #tpu.memory_space<vmem>>) attributes {dimension_semantics = [#tpu.dimension_semantics<parallel>], iteration_bounds = array<i64: 1>, scalar_prefetch = 0 : i64, scratch_operands = 0 : i64, tpu.core_type = #tpu.core_type<tc>, window_params = [{transform_indices = @transform_0, window_bounds = array<i64: 2, 1024>}, {transform_indices = @transform_1, window_bounds = array<i64: 2, 1024>}]} {
    %c0 = arith.constant 0 : index
    %c0_0 = arith.constant 0 : index
    %0 = vector.load %arg1[%c0, %c0_0] : memref<2x1024xf32, #tpu.memory_space<vmem>>, vector<2x1024xf32>
    %cst = arith.constant 0.000000e+00 : f32
    %1 = vector.broadcast %cst : f32 to vector<2x1024xf32>
    %2 = arith.cmpf oge, %0, %1 : vector<2x1024xf32>
    %cst_1 = arith.constant 1.000000e+00 : f32
    %cst_2 = arith.constant -1.000000e+00 : f32
    %3 = vector.broadcast %cst_1 : f32 to vector<2x1024xf32>
    %4 = vector.broadcast %cst_2 : f32 to vector<2x1024xf32>
    %5 = arith.select %2, %3, %4 : vector<2x1024xi1>, vector<2x1024xf32>
    %c0_3 = arith.constant 0 : index
    %c0_4 = arith.constant 0 : index
    %6 = vector.load %arg2[%c0_3, %c0_4] : memref<2x1024xf32, #tpu.memory_space<vmem>>, vector<2x1024xf32>
    tpu.vector_store %arg2[%c0_3, %c0_4], %5 {strides = array<i32>} : memref<2x1024xf32, #tpu.memory_space<vmem>>, vector<2x1024xf32>,
    return
  }
  func.func @transform_0(%arg0: i32) -> (i32, i32) {
    %c0_i32 = arith.constant 0 : i32
    %c0_i32_0 = arith.constant 0 : i32
    return %arg0, %c0_i32 : i32, i32
  }
  func.func @transform_1(%arg0: i32) -> (i32, i32) {
    %c0_i32 = arith.constant 0 : i32
    %c0_i32_0 = arith.constant 0 : i32
    return %arg0, %c0_i32 : i32, i32
  }
}

</mosaic_0001>

<llo_original>
// kernel: tpu_custom_call.1
$region0: #{tpu_custom_call.1}
  #allocation0 [shape = 'u32[]', space=smem, size = 0x4, offset = 0x4, fixed_abs, tag = 'smem constant byte address 0x4 - core index']
  #allocation1 [shape = 'u32[72,128]{1,0:T(1,128)}', space=vmem, size = 0x9000, scoped, tag = 'internal scratch']
  %s0 = inlined_call_operand.hbm [shape: f32[2,1024], index: 0, kind: input, shape index: {}]
  %s1 = inlined_call_operand.hbm [shape: f32[2,1024], index: 1, kind: output, shape index: {}]
  %s2 = sld [smem:[#allocation0]]
  $region18: #{tpu_custom_call.1} parent=0
    _
  %s4 = ssub.s32 1, %s2
  %s5 = scalar_select 0, %s4, %s2
  $region1: #{tpu_custom_call.1} parent=0
    #allocation2 [shape = 'u8[8192]{0}', space=vmem, size = 0x2000, scoped, tag = 'input window, operand 0, single buffered']
    #allocation3 [shape = 's32[1]{0}', space=sflag, size = 0x4, scoped, tag = 'scoped memory for tpu_custom_call.1']
    #allocation4 [shape = 's32[1]{0}', space=sflag, size = 0x4, scoped, tag = 'scoped memory for tpu_custom_call.1']
    #allocation5 [shape = 'u8[8192]{0}', space=vmem, size = 0x2000, scoped, tag = 'output window, operand 0, single buffered']
    %6 = vsyncpa [#allocation3], 0
    %7 = vsyncpa [#allocation4], 0
    // Predicated region
    $region2: #{tpu_custom_call.1} parent=1 // pred_check
      _
    $region3: #{tpu_custom_call.1} parent=1 // pred_check_branch
      %9 = sbr.rel (0) target = $region5
    $region4: #{tpu_custom_call.1} parent=1 // pred_region
      %11 = vsyncadd [#allocation3], 0
      %s13 = sshll.u32 %s0, 4
      %s14 = int_to_ptr.hbm [resolvable:$true] %s13
      %s15 = sshll.u32 [#allocation2], 4
      %s16 = int_to_ptr.vmem [resolvable:$true] %s15
      %18 = dma.hbm_to_vmem [thread:$0]  %s14, 256, %s16, [#allocation3]
    $region5: #{tpu_custom_call.1} parent=1 // pred_fallthru
      _
    // Predicated region
    $region6: #{tpu_custom_call.1} parent=1 // pred_check
      _
    $region7: #{tpu_custom_call.1} parent=1 // pred_check_branch
      %20 = sbr.rel (0) target = $region9
    $region8: #{tpu_custom_call.1} parent=1 // pred_region
      %22 = dma.done [#allocation3], 256
    $region9: #{tpu_custom_call.1} parent=1 // pred_fallthru
      _
    %v23 = vld [vmem:[#allocation2] sm:$0xff]
    %v24 = vld [vmem:[#allocation2 + $0x8] sm:$0xff]
    %vm25 = vcmp.ge.f32.partialorder %v23, 0.0
    %vm26 = vcmp.ge.f32.partialorder %v24, 0.0
    %v27 = vsel %vm25, 1.0, -1.0
    %v28 = vsel %vm26, 1.0, -1.0
    %29 = vst [vmem:[#allocation5] sm:$0xff] %v27
    %30 = vst [vmem:[#allocation5 + $0x8] sm:$0xff] %v28
    // Predicated region
    $region10: #{tpu_custom_call.1} parent=1 // pred_check
      _
    $region11: #{tpu_custom_call.1} parent=1 // pred_check_branch
      %32 = sbr.rel (0) target = $region13
    $region12: #{tpu_custom_call.1} parent=1 // pred_region
      %34 = vsyncadd [#allocation4], 0
      %s36 = sshll.u32 [#allocation5], 4
      %s37 = int_to_ptr.vmem [resolvable:$true] %s36
      %s38 = sshll.u32 %s1, 4
      %s39 = int_to_ptr.hbm [resolvable:$true] %s38
      %41 = dma.vmem_to_hbm [thread:$0]  %s37, 256, %s39, [#allocation4]
    $region13: #{tpu_custom_call.1} parent=1 // pred_fallthru
      _
    // Predicated region
    $region14: #{tpu_custom_call.1} parent=1 // pred_check
      _
    $region15: #{tpu_custom_call.1} parent=1 // pred_check_branch
      %43 = sbr.rel (0) target = $region17
    $region16: #{tpu_custom_call.1} parent=1 // pred_region
      %45 = dma.done [#allocation4], 256
    $region17: #{tpu_custom_call.1} parent=1 // pred_fallthru
      _
    %46 = vsyncpa [#allocation3], 1
    %47 = vsyncpa [#allocation4], 1

</llo_original>
